<compile_context>
chip_gen: v6e
topology: v6e:2x2x1
jax: 0.10.0
libtpu: 0.0.40
codegen_flags: <defaults>
</compile_context>

<pallas_src>
import numpy as np
import jax
import jax.numpy as jnp
from jax import lax
from jax.experimental import pallas as pl
from jax.experimental.pallas import tpu as pltpu

MIN_SCORE = -1e5  # stand-in for the module-level MIN_SCORE constant
LANE = 128


def _round_up(x, m):
    return -(-x // m) * m


# ---------------------------------------------------------------------------
# Kernel 1: hidden2emission MLP  (Linear -> ReLU -> Linear), the matmul hot path
# Row-tiled over the flattened (T*B) axis; weights/biases are grid-invariant
# (constant index maps -> VMEM resident), weights arrive pre-cast to bf16.
# ---------------------------------------------------------------------------
def _mlp_kernel(x_ref, w1_ref, b1_ref, w2_ref, b2_ref, out_ref):
    # bf16 MXU inputs, f32 accumulation, f32 epilogue (bias + ReLU).
    h = jnp.dot(x_ref[...].astype(jnp.bfloat16), w1_ref[...],
                preferred_element_type=jnp.float32)
    h = jnp.maximum(h + b1_ref[...], 0.0)
    out_ref[...] = (
        jnp.dot(h.astype(jnp.bfloat16), w2_ref[...],
                preferred_element_type=jnp.float32)
        + b2_ref[...]
    )


def emission_mlp(x, w1_bf16, b1, w2_bf16, b2, row_tile=512):
    """x: (N, H) f32 -> (N, NT_PAD) f32 emissions (padded tag cols = MIN_SCORE).

    w1_bf16: (H, H2_PAD) bf16, b1: (1, H2_PAD) f32,
    w2_bf16: (H2_PAD, NT_PAD) bf16, b2: (1, NT_PAD) f32.
    """
    N, H = x.shape
    H2P = w1_bf16.shape[1]
    NTP = w2_bf16.shape[1]

    # Avoid the pad/unpad passes whenever possible (review item).
    if N % row_tile == 0:
        tn, n_pad = row_tile, N
    elif N <= row_tile:
        tn, n_pad = N, N
    else:
        tn = row_tile
        n_pad = _round_up(N, tn)
        x = jnp.pad(x, ((0, n_pad - N), (0, 0)))

    out = pl.pallas_call(
        _mlp_kernel,
        out_shape=jax.ShapeDtypeStruct((n_pad, NTP), jnp.float32),
        grid_spec=pltpu.PrefetchScalarGridSpec(
            num_scalar_prefetch=0,
            grid=(n_pad // tn,),
            in_specs=[
                pl.BlockSpec((tn, H), lambda i: (i, 0)),
                pl.BlockSpec((H, H2P), lambda i: (0, 0)),
                pl.BlockSpec((1, H2P), lambda i: (0, 0)),
                pl.BlockSpec((H2P, NTP), lambda i: (0, 0)),
                pl.BlockSpec((1, NTP), lambda i: (0, 0)),
            ],
            out_specs=pl.BlockSpec((tn, NTP), lambda i: (i, 0)),
        ),
        compiler_params=pltpu.CompilerParams(dimension_semantics=("parallel",)),
    )(x, w1_bf16, b1, w2_bf16, b2)
    return out if n_pad == N else out[:N]


# ---------------------------------------------------------------------------
# Kernel 2: Viterbi forward recurrence.
# Grid = (batch tiles ["parallel"], time chunks ["arbitrary"]).  For each batch
# tile the time chunks run in order; the running forward variable and the
# per-sentence final forward scores persist across chunks in VMEM scratch and
# are carried in registers inside each chunk's fori_loop.  Outputs:
#   - backpointers (T_PAD, B_PAD, NT_PAD) 16-bit (bp[t] == torch backpointers[t-1])
#   - final forward scores (B_PAD, NT_PAD) f32 captured at t == lens[b]-1.
# ---------------------------------------------------------------------------
def _viterbi_kernel(em_ref, trans_ref, lens_ref, bp_ref, final_ref,
                    prev_sc, final_sc):
    TC, TB, NTP = em_ref.shape
    t_idx = pl.program_id(1)
    t_base = t_idx * TC

    # Loop invariants hoisted out of the time loop: transition stays 2-D (implicit
    # broadcast in the add, no tb-times materialized copy), iota built once.
    trans = trans_ref[...]                                        # (NTP, NTP)
    lens_col = lens_ref[...]                                      # (TB, 1) int32
    prev_iota = lax.broadcasted_iota(jnp.int32, (1, 1, NTP), 2)

    @pl.when(t_idx == 0)
    def _():
        em0 = em_ref[0]
        prev_sc[...] = em0
        final_sc[...] = em0            # correct final value when lens == 1
        bp_ref[0] = jnp.zeros((TB, NTP), bp_ref.dtype)   # bp[0] is never read

    def body(t, carry):
        fwd, fin = carry
        # scores[b, curr, prev] = fwd[b, prev] + transition[curr, prev]
        scores = fwd[:, None, :] + trans[None, :, :]              # (TB, NTP, NTP)
        max_var = jnp.max(scores, axis=-1)
        # first-max argmax (numpy/torch tie-breaking) via masked-iota min
        max_id = jnp.min(
            jnp.where(scores == max_var[..., None], prev_iota, NTP), axis=-1)
        fwd = max_var + em_ref[t]
        bp_ref[t] = max_id.astype(bp_ref.dtype)
        # capture the forward scores at the last valid step of each sentence
        fin = jnp.where(lens_col == t_base + t + 1, fwd, fin)
        return fwd, fin

    # Skip t==0 only on the first chunk (handled by the init above).
    t_start = jnp.where(t_idx == 0, 1, 0)
    fwd, fin = lax.fori_loop(t_start, TC, body, (prev_sc[...], final_sc[...]))
    prev_sc[...] = fwd
    final_sc[...] = fin

    @pl.when(t_idx == pl.num_programs(1) - 1)
    def _():
        final_ref[...] = final_sc[...]


def viterbi_forward(emissions_padded, transition_padded, lens,
                    batch_tile=8, time_chunk=128):
    """Returns (bp (T_PAD,B_PAD,NT_PAD) 16-bit/int32, final (B_PAD,NT_PAD) f32)."""
    T, B, NTP = emissions_padded.shape
    lens = jnp.asarray(lens, dtype=jnp.int32)     # robust to int64/host dtypes

    # bf16 holds integers up to 256 exactly -> safe container for tag ids when
    # NT_PAD <= 256; fall back to int32 otherwise (review overflow concern).
    bp_dtype = jnp.bfloat16 if NTP <= 256 else jnp.int32

    tb = batch_tile
    # >= 2 batch tiles so v7x's two TensorCores both get work (review item).
    b_tiles = max(2, pl.cdiv(B, tb))
    b_pad = b_tiles * tb
    # Time chunking: caps VMEM independent of T and restores DMA/compute overlap.
    n_tc = pl.cdiv(T, time_chunk)
    tc = pl.cdiv(T, n_tc)
    t_pad = tc * n_tc

    if (b_pad != B) or (t_pad != T):
        emissions_padded = jnp.pad(
            emissions_padded, ((0, t_pad - T), (0, b_pad - B), (0, 0)),
            constant_values=MIN_SCORE)
    if b_pad != B:
        lens = jnp.pad(lens, (0, b_pad - B), constant_values=1)
    lens2 = lens.reshape(b_pad, 1)

    bp, final = pl.pallas_call(
        _viterbi_kernel,
        out_shape=(
            jax.ShapeDtypeStruct((t_pad, b_pad, NTP), bp_dtype),
            jax.ShapeDtypeStruct((b_pad, NTP), jnp.float32),
        ),
        grid_spec=pltpu.PrefetchScalarGridSpec(
            num_scalar_prefetch=0,
            grid=(b_tiles, n_tc),
            in_specs=[
                pl.BlockSpec((tc, tb, NTP), lambda b, t: (t, b, 0)),
                pl.BlockSpec((NTP, NTP), lambda b, t: (0, 0)),
                pl.BlockSpec((tb, 1), lambda b, t: (b, 0)),
            ],
            out_specs=[
                pl.BlockSpec((tc, tb, NTP), lambda b, t: (t, b, 0)),
                pl.BlockSpec((tb, NTP), lambda b, t: (b, 0)),
            ],
            scratch_shapes=[
                pltpu.VMEM((tb, NTP), jnp.float32),   # running forward variable
                pltpu.VMEM((tb, NTP), jnp.float32),   # captured final scores
            ],
        ),
        compiler_params=pltpu.CompilerParams(
            dimension_semantics=("parallel", "arbitrary")),
    )(emissions_padded, transition_padded, lens2)
    return bp, final


# ---------------------------------------------------------------------------
# LinearCRF (forward only): emission MLP + batch Viterbi decode
# ---------------------------------------------------------------------------
class LinearCRF:
    def __init__(self, hidden_size, num_tags, transition_constraints, key):
        k1, k2, k3, k4, k5 = jax.random.split(key, 5)
        h2 = hidden_size // 2
        self.hidden_size = hidden_size
        self.num_tags = num_tags
        self.nt_pad = _round_up(num_tags, LANE)
        self.h2_pad = _round_up(h2, LANE)

        w1 = jax.random.normal(k1, (hidden_size, h2), jnp.float32) / np.sqrt(hidden_size)
        b1 = jax.random.normal(k2, (1, h2), jnp.float32) * 0.01
        w2 = jax.random.normal(k3, (h2, num_tags), jnp.float32) / np.sqrt(h2)
        b2 = jax.random.normal(k4, (1, num_tags), jnp.float32) * 0.01
        raw_trans = jax.random.normal(k5, (num_tags, num_tags), jnp.float32)
        # equivalent of the masked `transition` property
        self.transition = jnp.where(transition_constraints == 0, MIN_SCORE, raw_trans)

        # Lane-dense (padded) parameters used by the kernels.
        #  * w1/b1 zero-pad the hidden//2 axis to a 128 multiple (numerically inert:
        #    ReLU(0)=0 feeds zero rows of w2).
        #  * w2/b2 pad tag columns so padded emissions are exactly MIN_SCORE.
        #  * Weights are cast to bf16 ONCE here (grid-invariant in the MLP kernel);
        #    biases stay f32 and are added after the f32 MXU accumulation.
        #    NOTE: bf16 MXU inputs mean emissions differ slightly from an f32
        #    PyTorch Linear; near-tied Viterbi argmaxes may diverge accordingly.
        w1_p = jnp.zeros((hidden_size, self.h2_pad), jnp.float32).at[:, :h2].set(w1)
        w2_p = jnp.zeros((self.h2_pad, self.nt_pad), jnp.float32).at[:h2, :num_tags].set(w2)
        self.w1_bf16 = w1_p.astype(jnp.bfloat16)
        self.w2_bf16 = w2_p.astype(jnp.bfloat16)
        self.b1_padded = jnp.zeros((1, self.h2_pad), jnp.float32).at[:, :h2].set(b1)
        self.b2_padded = jnp.full((1, self.nt_pad), MIN_SCORE, jnp.float32).at[
            :, :num_tags].set(b2)
        self.transition_padded = jnp.full(
            (self.nt_pad, self.nt_pad), MIN_SCORE, jnp.float32
        ).at[:num_tags, :num_tags].set(self.transition)
        # TODO(synk): optional MultiHeadedAttention branch (attention_num_heads) not
        # implemented; the default attention=None path is reproduced here.

    def _emission(self, hidden):
        T, B, H = hidden.shape
        x = hidden.reshape(T * B, H)
        em = emission_mlp(x, self.w1_bf16, self.b1_padded,
                          self.w2_bf16, self.b2_padded)
        return em.reshape(T, B, self.nt_pad)

    def forward(self, hidden, lens):
        nt = self.num_tags
        T, B, _ = hidden.shape
        emissions_p = self._emission(hidden)                # (T, B, NT_PAD) f32
        bp, final = viterbi_forward(emissions_p, self.transition_padded, lens)

        # best tag / score selected on device; only small/narrow arrays cross to host.
        best_ids = jnp.argmax(final[:B, :nt], axis=-1)
        best_scores = jnp.max(final[:B, :nt], axis=-1)
        bp_small = bp[:T, :B, :nt]                          # 16-bit tag ids

        bp_np = np.asarray(jax.block_until_ready(bp_small)).astype(np.int32)
        best_ids_np = np.asarray(best_ids)
        best_scores_np = np.asarray(best_scores)
        lens_np = np.asarray(lens)

        # host-side backtrace (ragged, data-dependent — same as the PyTorch loop)
        results = []
        for sid in range(B):
            slen = int(lens_np[sid])
            path = [int(best_ids_np[sid])]
            for time in range(slen - 2, -1, -1):
                path.append(int(bp_np[time + 1, sid, path[-1]]))
            path.reverse()
            results.append((path, float(best_scores_np[sid])))
        return results, emissions_p[:, :, :nt]


def _ref_viterbi_np(em, trans, lens):
    """Pure-numpy reference of batch_viterbi_decode for a consistency check."""
    T, B, NT = em.shape
    out = []
    for b in range(B):
        L = int(lens[b])
        fwd = em[0, b].copy()
        bps = []
        for t in range(1, L):
            sc = fwd[None, :] + trans  # (curr, prev)
            bps.append(sc.argmax(-1))
            fwd = sc.max(-1) + em[t, b]
        best = int(fwd.argmax())
        path = [best]
        for bp in reversed(bps):
            path.append(int(bp[path[-1]]))
        path.reverse()
        out.append((path, float(fwd.max())))
    return out


if __name__ == "__main__":
    key = jax.random.PRNGKey(0)
    k_h, k_p, k_c = jax.random.split(key, 3)

    T, B, H, NT = 8, 2, 32, 8  # seq=8, batch=2, hidden=32, num_tags=8
    hidden = jax.random.normal(k_h, (T, B, H), jnp.float32)
    lens = jnp.array([8, 5], dtype=jnp.int32)
    # deterministic transition constraints (1 = allowed, 0 = forbidden)
    constraints = (jax.random.uniform(k_c, (NT, NT)) > 0.15).astype(jnp.float32)

    crf = LinearCRF(H, NT, constraints, k_p)
    results, emissions = crf.forward(hidden, lens)
    emissions = jax.block_until_ready(emissions)

    # consistency check of the Viterbi recurrence against numpy on the same emissions
    em_np = np.asarray(emissions)
    trans_np = np.asarray(crf.transition)
    ref = _ref_viterbi_np(em_np, trans_np, np.asarray(lens))
    for (p_k, s_k), (p_r, s_r) in zip(results, ref):
        assert p_k == p_r, (p_k, p_r)
        assert abs(s_k - s_r) < 1e-3, (s_k, s_r)

    print("KERNEL_OK")
</pallas_src>

<mosaic_0001>
module attributes {stable_mosaic.version = 11 : i64} {
  func.func @_mlp_kernel(%arg0: i32, %arg1: memref<16x32xf32, #tpu.memory_space<vmem>>, %arg2: memref<32x128xbf16, #tpu.memory_space<vmem>>, %arg3: memref<1x128xf32, #tpu.memory_space<vmem>>, %arg4: memref<128x128xbf16, #tpu.memory_space<vmem>>, %arg5: memref<1x128xf32, #tpu.memory_space<vmem>>, %arg6: memref<16x128xf32, #tpu.memory_space<vmem>>) attributes {dimension_semantics = [#tpu.dimension_semantics<parallel>], iteration_bounds = array<i64: 1>, scalar_prefetch = 0 : i64, scratch_operands = 0 : i64, tpu.core_type = #tpu.core_type<tc>, window_params = [{transform_indices = @transform_0, window_bounds = array<i64: 16, 32>}, {pipeline_mode = #tpu.pipeline_mode<synchronous>, transform_indices = @transform_1, window_bounds = array<i64: 32, 128>}, {pipeline_mode = #tpu.pipeline_mode<synchronous>, transform_indices = @transform_2, window_bounds = array<i64: 1, 128>}, {pipeline_mode = #tpu.pipeline_mode<synchronous>, transform_indices = @transform_3, window_bounds = array<i64: 128, 128>}, {pipeline_mode = #tpu.pipeline_mode<synchronous>, transform_indices = @transform_4, window_bounds = array<i64: 1, 128>}, {transform_indices = @transform_5, window_bounds = array<i64: 16, 128>}]} {
    %c0 = arith.constant 0 : index
    %c0_0 = arith.constant 0 : index
    %0 = vector.load %arg1[%c0, %c0_0] : memref<16x32xf32, #tpu.memory_space<vmem>>, vector<16x32xf32>
    %1 = arith.truncf %0 : vector<16x32xf32> to vector<16x32xbf16>
    %c0_1 = arith.constant 0 : index
    %c0_2 = arith.constant 0 : index
    %2 = vector.load %arg2[%c0_1, %c0_2] : memref<32x128xbf16, #tpu.memory_space<vmem>>, vector<32x128xbf16>
    %cst = arith.constant dense<0.000000e+00> : vector<16x128xf32>
    %3 = tpu.matmul %1, %2, %cst {dimension_numbers = #tpu.dot_dimension_numbers<[1], [0], [0], [1], [0, 0, 1, 1], [], []>} : vector<16x32xbf16>, vector<32x128xbf16>, vector<16x128xf32> -> vector<16x128xf32>
    %c0_3 = arith.constant 0 : index
    %c0_4 = arith.constant 0 : index
    %4 = vector.load %arg3[%c0_3, %c0_4] : memref<1x128xf32, #tpu.memory_space<vmem>>, vector<1x128xf32>
    %5 = vector.broadcast %4 : vector<1x128xf32> to vector<16x128xf32>
    %6 = arith.addf %3, %5 : vector<16x128xf32>
    %cst_5 = arith.constant 0.000000e+00 : f32
    %7 = vector.broadcast %cst_5 : f32 to vector<16x128xf32>
    %8 = arith.maximumf %6, %7 : vector<16x128xf32>
    %9 = arith.truncf %8 : vector<16x128xf32> to vector<16x128xbf16>
    %c0_6 = arith.constant 0 : index
    %c0_7 = arith.constant 0 : index
    %10 = vector.load %arg4[%c0_6, %c0_7] : memref<128x128xbf16, #tpu.memory_space<vmem>>, vector<128x128xbf16>
    %cst_8 = arith.constant dense<0.000000e+00> : vector<16x128xf32>
    %11 = tpu.matmul %9, %10, %cst_8 {dimension_numbers = #tpu.dot_dimension_numbers<[1], [0], [0], [1], [0, 0, 1, 1], [], []>} : vector<16x128xbf16>, vector<128x128xbf16>, vector<16x128xf32> -> vector<16x128xf32>
    %c0_9 = arith.constant 0 : index
    %c0_10 = arith.constant 0 : index
    %12 = vector.load %arg5[%c0_9, %c0_10] : memref<1x128xf32, #tpu.memory_space<vmem>>, vector<1x128xf32>
    %13 = vector.broadcast %12 : vector<1x128xf32> to vector<16x128xf32>
    %14 = arith.addf %11, %13 : vector<16x128xf32>
    %c0_11 = arith.constant 0 : index
    %c0_12 = arith.constant 0 : index
    %15 = vector.load %arg6[%c0_11, %c0_12] : memref<16x128xf32, #tpu.memory_space<vmem>>, vector<16x128xf32>
    tpu.vector_store %arg6[%c0_11, %c0_12], %14 {strides = array<i32>} : memref<16x128xf32, #tpu.memory_space<vmem>>, vector<16x128xf32>,
    return
  }
  func.func @transform_0(%arg0: i32) -> (i32, i32) {
    %c0_i32 = arith.constant 0 : i32
    %c0_i32_0 = arith.constant 0 : i32
    return %arg0, %c0_i32 : i32, i32
  }
  func.func @transform_1(%arg0: i32) -> (i32, i32) {
    %c0_i32 = arith.constant 0 : i32
    %c0_i32_0 = arith.constant 0 : i32
    %c0_i32_1 = arith.constant 0 : i32
    return %c0_i32, %c0_i32_0 : i32, i32
  }
  func.func @transform_2(%arg0: i32) -> (i32, i32) {
    %c0_i32 = arith.constant 0 : i32
    %c0_i32_0 = arith.constant 0 : i32
    %c0_i32_1 = arith.constant 0 : i32
    return %c0_i32, %c0_i32_0 : i32, i32
  }
  func.func @transform_3(%arg0: i32) -> (i32, i32) {
    %c0_i32 = arith.constant 0 : i32
    %c0_i32_0 = arith.constant 0 : i32
    %c0_i32_1 = arith.constant 0 : i32
    return %c0_i32, %c0_i32_0 : i32, i32
  }
  func.func @transform_4(%arg0: i32) -> (i32, i32) {
    %c0_i32 = arith.constant 0 : i32
    %c0_i32_0 = arith.constant 0 : i32
    %c0_i32_1 = arith.constant 0 : i32
    return %c0_i32, %c0_i32_0 : i32, i32
  }
  func.func @transform_5(%arg0: i32) -> (i32, i32) {
    %c0_i32 = arith.constant 0 : i32
    %c0_i32_0 = arith.constant 0 : i32
    return %arg0, %c0_i32 : i32, i32
  }
}

</mosaic_0001>

<llo_original>
// kernel: tpu_custom_call.1
$region0: #{tpu_custom_call.1}
  #allocation0 [shape = 'u32[]', space=smem, size = 0x4, offset = 0x4, fixed_abs, tag = 'smem constant byte address 0x4 - core index']
  #allocation1 [shape = 'u32[144,128]{1,0:T(1,128)}', space=vmem, size = 0x12000, scoped, tag = 'internal scratch']
  %s0 = inlined_call_operand.hbm [shape: f32[16,32], index: 0, kind: input, shape index: {}]
  %s1 = inlined_call_operand.hbm [shape: bf16[32,128], index: 1, kind: input, shape index: {}]
  %s2 = inlined_call_operand.vmem [shape: f32[1,128], index: 2, kind: input, shape index: {}]
  %s3 = inlined_call_operand.hbm [shape: bf16[128,128], index: 3, kind: input, shape index: {}]
  %s4 = inlined_call_operand.vmem [shape: f32[1,128], index: 4, kind: input, shape index: {}]
  %s5 = inlined_call_operand.hbm [shape: f32[16,128], index: 5, kind: output, shape index: {}]
  %s6 = sld [smem:[#allocation0]]
  $region42: #{tpu_custom_call.1} parent=0
    _
  %s8 = ssub.s32 1, %s6
  %s9 = scalar_select 0, %s8, %s6
  $region1: #{tpu_custom_call.1} parent=0
    #allocation2 [shape = 'u8[8192]{0}', space=vmem, size = 0x2000, scoped, tag = 'input window, operand 0, single buffered']
    #allocation3 [shape = 's32[1]{0}', space=sflag, size = 0x4, scoped, tag = 'scoped memory for tpu_custom_call.1']
    #allocation4 [shape = 's32[1]{0}', space=sflag, size = 0x4, scoped, tag = 'scoped memory for tpu_custom_call.1']
    #allocation5 [shape = 'u8[8192]{0}', space=vmem, size = 0x2000, scoped, tag = 'input window, operand 1, single buffered']
    #allocation6 [shape = 's32[1]{0}', space=sflag, size = 0x4, scoped, tag = 'scoped memory for tpu_custom_call.1']
    #allocation7 [shape = 'u8[32768]{0}', space=vmem, size = 0x8000, scoped, tag = 'input window, operand 3, single buffered']
    #allocation8 [shape = 'u8[8192]{0}', space=vmem, size = 0x2000, scoped, tag = 'output window, operand 0, single buffered']
    %10 = vsyncpa [#allocation3], 0
    %11 = vsyncpa [#allocation6], 0
    %12 = vsyncpa [#allocation4], 0
    // Predicated region
    $region2: #{tpu_custom_call.1} parent=1 // pred_check
      _
    $region3: #{tpu_custom_call.1} parent=1 // pred_check_branch
      %14 = sbr.rel (0) target = $region5
    $region4: #{tpu_custom_call.1} parent=1 // pred_region
      %s16 = ssub.s32 256, 256
      %17 = vsyncadd [#allocation3], %s16
      %s18 = sshll.u32 [#allocation2], 4
      %s19 = int_to_ptr.vmem [resolvable:$true] %s18
      %24 = dma.hbm_to_vmem [thread:$0]  %s0, 256, %s19, [#allocation3], 128, 128, 8
    $region5: #{tpu_custom_call.1} parent=1 // pred_fallthru
      _
    // Predicated region
    $region6: #{tpu_custom_call.1} parent=1 // pred_check
      _
    $region7: #{tpu_custom_call.1} parent=1 // pred_check_branch
      %26 = sbr.rel (0) target = $region9
    $region8: #{tpu_custom_call.1} parent=1 // pred_region
      %s28 = ssub.s32 256, 256
      %29 = vsyncadd [#allocation6], %s28
      %s30 = sshll.u32 [#allocation5], 4
      %s31 = int_to_ptr.vmem [resolvable:$true] %s30
      %36 = dma.hbm_to_vmem [thread:$0]  %s1, 256, %s31, [#allocation6], 64, 64, 4
    $region9: #{tpu_custom_call.1} parent=1 // pred_fallthru
      _
    // Predicated region
    $region10: #{tpu_custom_call.1} parent=1 // pred_check
      _
    $region11: #{tpu_custom_call.1} parent=1 // pred_check_branch
      %38 = sbr.rel (0) target = $region13
    $region12: #{tpu_custom_call.1} parent=1 // pred_region
      _
    $region13: #{tpu_custom_call.1} parent=1 // pred_fallthru
      _
    // Predicated region
    $region14: #{tpu_custom_call.1} parent=1 // pred_check
      _
    $region15: #{tpu_custom_call.1} parent=1 // pred_check_branch
      %40 = sbr.rel (0) target = $region17
    $region16: #{tpu_custom_call.1} parent=1 // pred_region
      %s42 = ssub.s32 1024, 1024
      %43 = vsyncadd [#allocation6], %s42
      %s44 = sshll.u32 [#allocation7], 4
      %s45 = int_to_ptr.vmem [resolvable:$true] %s44
      %50 = dma.hbm_to_vmem [thread:$0]  %s3, 1024, %s45, [#allocation6], 64, 64, 4
    $region17: #{tpu_custom_call.1} parent=1 // pred_fallthru
      _
    // Predicated region
    $region18: #{tpu_custom_call.1} parent=1 // pred_check
      _
    $region19: #{tpu_custom_call.1} parent=1 // pred_check_branch
      %52 = sbr.rel (0) target = $region21
    $region20: #{tpu_custom_call.1} parent=1 // pred_region
      _
    $region21: #{tpu_custom_call.1} parent=1 // pred_fallthru
      _
    // Predicated region
    $region22: #{tpu_custom_call.1} parent=1 // pred_check
      _
    $region23: #{tpu_custom_call.1} parent=1 // pred_check_branch
      %54 = sbr.rel (0) target = $region25
    $region24: #{tpu_custom_call.1} parent=1 // pred_region
      %55 = dma.done [#allocation3], 256
    $region25: #{tpu_custom_call.1} parent=1 // pred_fallthru
      _
    // Predicated region
    $region26: #{tpu_custom_call.1} parent=1 // pred_check
      _
    $region27: #{tpu_custom_call.1} parent=1 // pred_check_branch
      %57 = sbr.rel (0) target = $region29
    $region28: #{tpu_custom_call.1} parent=1 // pred_region
      %58 = dma.done [#allocation6], 256
    $region29: #{tpu_custom_call.1} parent=1 // pred_fallthru
      _
    // Predicated region
    $region30: #{tpu_custom_call.1} parent=1 // pred_check
      _
    $region31: #{tpu_custom_call.1} parent=1 // pred_check_branch
      %60 = sbr.rel (0) target = $region33
    $region32: #{tpu_custom_call.1} parent=1 // pred_region
      %61 = dma.done [#allocation6], 1024
    $region33: #{tpu_custom_call.1} parent=1 // pred_fallthru
      _
    %v63 = vld [vmem:[#allocation2] sm:$0xff]
    %v64 = vld [vmem:[#allocation2 + $0x8] sm:$0xff]
    %v65 = vpack.c.bf16 %v64, %v63
    %v66 = vld [vmem:[#allocation5] sm:$0xf]
    %v67 = vld [vmem:[#allocation5 + $0x4] sm:$0xf]
    %v68 = vld [vmem:[#allocation5 + $0x8] sm:$0xf]
    %v69 = vld [vmem:[#allocation5 + $0xc] sm:$0xf]
    %v70 = vld [vmem:[%s2] sm:$0x1]
    %v72 = vlaneseq
    %v73 = vshrl.u32 %v72, 7
    %v74 = vsub.s32 0, %v73
    %v75 = vrot.slane %v70, %v74
    %v81 = vunpack.c.l.b16 %v66
    %v82 = vunpack.c.l.b16 %v67
    %v83 = vunpack.c.l.b16 %v68
    %v84 = vunpack.c.l.b16 %v69
    %v85 = vpack.c.b16 %v82, %v81
    %v86 = vpack.c.b16 %v84, %v83
    %vm89 = vcmask 261120
    %v91 = vsel %vm89, %v65, 0
    %93 = vmatprep.subr.bf16.mxu0 0
    %94 = vmatpush1.bf16.msra.mxu0 0
    %95 = vmatprep.subr.bf16.mxu0 0
    %96 = vmatpush1.bf16.msra.mxu0 0
    %97 = vmatprep.subr.bf16.mxu0 0
    %98 = vmatpush1.bf16.msra.mxu0 0
    %99 = vmatprep.subr.bf16.mxu0 0
    %100 = vmatpush1.bf16.msra.mxu0 0
    %101 = vmatprep.subr.bf16.mxu0 0
    %102 = vmatpush1.bf16.msra.mxu0 0
    %103 = vmatprep.subr.bf16.mxu0 0
    %104 = vmatpush1.bf16.msra.mxu0 0
    %105 = vmatprep.subr.bf16.mxu0 0
    %106 = vmatpush1.bf16.msra.mxu0 %v86
    %107 = vmatprep.subr.bf16.mxu0 0
    %108 = vmatpush1.bf16.msra.mxu0 %v85
    %109 = vmatprep.subr.bf16.mxu0 0
    %110 = vmatpush2.bf16.msra.mxu0 0
    %111 = vmatprep.subr.bf16.mxu0 0
    %112 = vmatpush2.bf16.msra.mxu0 0
    %113 = vmatprep.subr.bf16.mxu0 0
    %114 = vmatpush2.bf16.msra.mxu0 0
    %115 = vmatprep.subr.bf16.mxu0 0
    %116 = vmatpush2.bf16.msra.mxu0 0
    %117 = vmatprep.subr.bf16.mxu0 0
    %118 = vmatpush2.bf16.msra.mxu0 0
    %119 = vmatprep.subr.bf16.mxu0 0
    %120 = vmatpush2.bf16.msra.mxu0 0
    %121 = vmatprep.subr.bf16.mxu0 0
    %122 = vmatpush2.bf16.msra.mxu0 0
    %123 = vmatprep.subr.bf16.mxu0 0
    %124 = vmatpush2.bf16.msra.mxu0 0
    %125 = vmatprep.mubr.bf16.mxu0 0
    %126 = vmatmul.mubr.bf16.gmra.mxu0 %v91
    %v127 = vpop.f32.mrf.mxu0
    %v128 = vadd.f32 %v75, %v127
    %v129 = vpop.f32.mrf.mxu0
    %v130 = vpop.f32.mrf.mxu0
    %v131 = vadd.f32 %v75, %v130
    %v132 = vpop.f32.mrf.mxu0
    %133 = vdwg.mxu0
    %v134 = vmax.f32 %v128, 0.0
    %v135 = vmax.f32 %v131, 0.0
    %v136 = vpack.c.bf16 %v135, %v134
    %v137 = vld [vmem:[#allocation7] sm:$0xf]
    %v138 = vld [vmem:[#allocation7 + $0x4] sm:$0xf]
    %v139 = vld [vmem:[#allocation7 + $0x8] sm:$0xf]
    %v140 = vld [vmem:[#allocation7 + $0xc] sm:$0xf]
    %v141 = vld [vmem:[#allocation7 + $0x10] sm:$0xf]
    %v142 = vld [vmem:[#allocation7 + $0x14] sm:$0xf]
    %v143 = vld [vmem:[#allocation7 + $0x18] sm:$0xf]
    %v144 = vld [vmem:[#allocation7 + $0x1c] sm:$0xf]
    %v145 = vld [vmem:[#allocation7 + $0x20] sm:$0xf]
    %v146 = vld [vmem:[#allocation7 + $0x24] sm:$0xf]
    %v147 = vld [vmem:[#allocation7 + $0x28] sm:$0xf]
    %v148 = vld [vmem:[#allocation7 + $0x2c] sm:$0xf]
    %v149 = vld [vmem:[#allocation7 + $0x30] sm:$0xf]
    %v150 = vld [vmem:[#allocation7 + $0x34] sm:$0xf]
    %v151 = vld [vmem:[#allocation7 + $0x38] sm:$0xf]
    %v152 = vld [vmem:[#allocation7 + $0x3c] sm:$0xf]
    %v153 = vld [vmem:[%s4] sm:$0x1]
    %v155 = vlaneseq
    %v156 = vshrl.u32 %v155, 7
    %v157 = vsub.s32 0, %v156
    %v158 = vrot.slane %v153, %v157
    %v176 = vunpack.c.l.b16 %v137
    %v177 = vunpack.c.l.b16 %v138
    %v178 = vunpack.c.l.b16 %v139
    %v179 = vunpack.c.l.b16 %v140
    %v180 = vunpack.c.l.b16 %v141
    %v181 = vunpack.c.l.b16 %v142
    %v182 = vunpack.c.l.b16 %v143
    %v183 = vunpack.c.l.b16 %v144
    %v184 = vunpack.c.l.b16 %v145
    %v185 = vunpack.c.l.b16 %v146
    %v186 = vunpack.c.l.b16 %v147
    %v187 = vunpack.c.l.b16 %v148
    %v188 = vunpack.c.l.b16 %v149
    %v189 = vunpack.c.l.b16 %v150
    %v190 = vunpack.c.l.b16 %v151
    %v191 = vunpack.c.l.b16 %v152
    %v192 = vpack.c.b16 %v177, %v176
    %v193 = vpack.c.b16 %v179, %v178
    %v194 = vpack.c.b16 %v181, %v180
    %v195 = vpack.c.b16 %v183, %v182
    %v196 = vpack.c.b16 %v185, %v184
    %v197 = vpack.c.b16 %v187, %v186
    %v198 = vpack.c.b16 %v189, %v188
    %v199 = vpack.c.b16 %v191, %v190
    %208 = vmatprep.subr.bf16.mxu0 0
    %209 = vmatpush1.bf16.msra.mxu0 %v199
    %210 = vmatprep.subr.bf16.mxu0 0
    %211 = vmatpush1.bf16.msra.mxu0 %v198
    %212 = vmatprep.subr.bf16.mxu0 0
    %213 = vmatpush1.bf16.msra.mxu0 %v197
    %214 = vmatprep.subr.bf16.mxu0 0
    %215 = vmatpush1.bf16.msra.mxu0 %v196
    %216 = vmatprep.subr.bf16.mxu0 0
    %217 = vmatpush1.bf16.msra.mxu0 %v195
    %218 = vmatprep.subr.bf16.mxu0 0
    %219 = vmatpush1.bf16.msra.mxu0 %v194
    %220 = vmatprep.subr.bf16.mxu0 0
    %221 = vmatpush1.bf16.msra.mxu0 %v193
    %222 = vmatprep.subr.bf16.mxu0 0
    %223 = vmatpush1.bf16.msra.mxu0 %v192
    %224 = vmatprep.subr.bf16.mxu0 0
    %225 = vmatpush2.bf16.msra.mxu0 0
    %226 = vmatprep.subr.bf16.mxu0 0
    %227 = vmatpush2.bf16.msra.mxu0 0
    %228 = vmatprep.subr.bf16.mxu0 0
    %229 = vmatpush2.bf16.msra.mxu0 0
    %230 = vmatprep.subr.bf16.mxu0 0
    %231 = vmatpush2.bf16.msra.mxu0 0
    %232 = vmatprep.subr.bf16.mxu0 0
    %233 = vmatpush2.bf16.msra.mxu0 0
    %234 = vmatprep.subr.bf16.mxu0 0
    %235 = vmatpush2.bf16.msra.mxu0 0
    %236 = vmatprep.subr.bf16.mxu0 0
    %237 = vmatpush2.bf16.msra.mxu0 0
    %238 = vmatprep.subr.bf16.mxu0 0
    %239 = vmatpush2.bf16.msra.mxu0 0
    %240 = vmatprep.mubr.bf16.mxu0 0
    %241 = vmatmul.mubr.bf16.gmra.mxu0 %v136
    %v242 = vpop.f32.mrf.mxu0
    %v243 = vadd.f32 %v158, %v242
    %v244 = vpop.f32.mrf.mxu0
    %v245 = vpop.f32.mrf.mxu0
    %v246 = vadd.f32 %v158, %v245
    %v247 = vpop.f32.mrf.mxu0
    %248 = vdwg.mxu0
    %249 = vst [vmem:[#allocation8] sm:$0xff] %v243
    %250 = vst [vmem:[#allocation8 + $0x8] sm:$0xff] %v246
    // Predicated region
    $region34: #{tpu_custom_call.1} parent=1 // pred_check
      _
    $region35: #{tpu_custom_call.1} parent=1 // pred_check_branch
      %252 = sbr.rel (0) target = $region37
    $region36: #{tpu_custom_call.1} parent=1 // pred_region
      %s254 = ssub.s32 256, 256
      %255 = vsyncadd [#allocation4], %s254
      %s256 = sshll.u32 [#allocation8], 4
      %s257 = int_to_ptr.vmem [resolvable:$true] %s256
      %262 = dma.vmem_to_hbm [thread:$0]  %s257, 256, %s5, [#allocation4], 128, 128, 8
    $region37: #{tpu_custom_call.1} parent=1 // pred_fallthru
      _
    // Predicated region
    $region38: #{tpu_custom_call.1} parent=1 // pred_check
      _
    $region39: #{tpu_custom_call.1} parent=1 // pred_check_branch
      %264 = sbr.rel (0) target = $region41
    $region40: #{tpu_custom_call.1} parent=1 // pred_region
      %265 = dma.done [#allocation4], 256
    $region41: #{tpu_custom_call.1} parent=1 // pred_fallthru
      _
    %266 = vsyncpa [#allocation3], 1
    %267 = vsyncpa [#allocation6], 1
    %268 = vsyncpa [#allocation4], 1

</llo_original>
